<compile_context>
chip_gen: v6e
topology: v6e:2x2x1
jax: 0.10.0
libtpu: 0.0.40
codegen_flags: <defaults>
</compile_context>

<pallas_src>
import math

import jax
import jax.numpy as jnp
from jax.experimental import pallas as pl
from jax.experimental.pallas import tpu as pltpu

# Synthetic irreps (deterministic, defined in-script):
#   lin1: "8x0e + 4x1o + 2x2e" (dim 30)  ->  "16x0e + 8x1o + 4x2e" (dim 60)
#   lin2: "16x0e + 8x1o + 4x2e"          ->  "1x0e"  (only the 0e block connects)
IRREPS_IN = [(8, 0), (4, 1), (2, 2)]      # (multiplicity, l)
IRREPS_MID = [(16, 0), (8, 1), (4, 2)]
SCALAR_MUL_MID = IRREPS_MID[0][0]         # 16 scalar channels feed lin2

DIN = sum(m * (2 * l + 1) for m, l in IRREPS_IN)     # 30
DMID = sum(m * (2 * l + 1) for m, l in IRREPS_MID)   # 60
ENERGY_COL = DMID                                    # lane 60 carries atomic energy
DMID_PAD = 128                                       # lane-dense output width


# ------------------------------- parameters --------------------------------

def make_params(key):
    """lin1 per-irrep mixes [mul_in, mul_out] and lin2 scalar mix [16, 1]."""
    ws1 = []
    for (mi, li), (mo, lo) in zip(IRREPS_IN, IRREPS_MID):
        assert li == lo, "o3.Linear only connects matching irreps"
        key, sub = jax.random.split(key)
        ws1.append(jax.random.normal(sub, (mi, mo), dtype=jnp.float32))
    key, sub = jax.random.split(key)
    w2 = jax.random.normal(sub, (SCALAR_MUL_MID, 1), dtype=jnp.float32)
    return ws1, w2


def expand_dense_weights(ws1, w2, atomic_scale, atomic_shift):
    """Glue: fold block o3.Linear weights into ONE dense, lane-padded matrix.

    Columns [0, DMID)       : lin1 features (block-diagonal o3.Linear, dense).
    Column  ENERGY_COL (=60): (lin1 @ lin2) * atomic_scale  -> atomic-energy lane.
    Columns (60, 128)       : zeros (keeps the output store lane-dense/unmasked).
    bias row                : atomic_shift only on the energy lane.
    """
    W1 = jnp.zeros((DIN, DMID_PAD), jnp.float32)
    oi = oo = 0
    for w, (mi, l), (mo, _) in zip(ws1, IRREPS_IN, IRREPS_MID):
        d = 2 * l + 1
        blk = jnp.kron(w / math.sqrt(mi), jnp.eye(d, dtype=jnp.float32))
        W1 = W1.at[oi:oi + mi * d, oo:oo + mo * d].set(blk)
        oi += mi * d
        oo += mo * d
    # lin2 ("1x0e") only touches the 0e block of the mid features; compose it
    # with lin1 and pre-bake atomic_scale, then park it in a spare lane of W1.
    w12 = (W1[:, :SCALAR_MUL_MID] @ (w2 / math.sqrt(SCALAR_MUL_MID))) * atomic_scale
    W1 = W1.at[:, ENERGY_COL:ENERGY_COL + 1].set(w12)

    bias = jnp.zeros((1, DMID_PAD), jnp.float32)
    bias = bias.at[0, ENERGY_COL].set(atomic_shift)
    return W1, bias


# ------------------------------ Pallas kernel -------------------------------

def energy_head_kernel(x_ref, w1_ref, b_ref, out_ref):
    # Single fused MXU pass: lin1 features AND (lin2 * scale) energy lane.
    h = jnp.dot(x_ref[...], w1_ref[...], preferred_element_type=jnp.float32)
    # atomic_shift lives only on the energy lane of the bias row.
    out_ref[...] = (h + b_ref[...]).astype(out_ref.dtype)


def _round_up(a, b):
    return pl.cdiv(a, b) * b


def energy_head(x, W1_pad, bias, *, tile_n=1024, out_dtype=None):
    """Returns the padded [n_pad, 128] feature slab.

    Consumer indexing (kept OUT of this wrapper to avoid an extra HBM copy):
        features      = slab[:N, :DMID]
        atomic_energy = slab[:N, ENERGY_COL:ENERGY_COL + 1]
    """
    N, din = x.shape
    assert din == DIN
    out_dtype = x.dtype if out_dtype is None else jnp.dtype(out_dtype)

    # Tile sizing: sublane multiple, large enough to amortize per-step overhead,
    # but keep >= 2 grid steps so both v7x TensorCores get work.
    tile_n = max(8, _round_up(int(tile_n), 8))
    if N > 8:
        tile_n = min(tile_n, max(8, _round_up(pl.cdiv(N, 2), 8)))
    tile_n = min(tile_n, _round_up(N, 8))
    n_pad = _round_up(N, tile_n)
    if n_pad != N:
        x = jnp.pad(x, ((0, n_pad - N), (0, 0)))

    out_bytes = n_pad * DMID_PAD * jnp.dtype(out_dtype).itemsize
    cost = pl.CostEstimate(
        flops=2 * n_pad * DIN * DMID_PAD + n_pad * DMID_PAD,
        transcendentals=0,
        bytes_accessed=(x.dtype.itemsize * n_pad * DIN
                        + 4 * (DIN * DMID_PAD + DMID_PAD)
                        + out_bytes),
    )

    feat_slab = pl.pallas_call(
        energy_head_kernel,
        out_shape=jax.ShapeDtypeStruct((n_pad, DMID_PAD), out_dtype),
        grid_spec=pltpu.PrefetchScalarGridSpec(
            num_scalar_prefetch=0,
            grid=(n_pad // tile_n,),
            in_specs=[
                pl.BlockSpec((tile_n, DIN), lambda i: (i, 0)),       # node tile
                pl.BlockSpec((DIN, DMID_PAD), lambda i: (0, 0)),     # fused W, resident
                pl.BlockSpec((1, DMID_PAD), lambda i: (0, 0)),       # shift row, resident
            ],
            out_specs=pl.BlockSpec((tile_n, DMID_PAD), lambda i: (i, 0)),
        ),
        compiler_params=pltpu.CompilerParams(dimension_semantics=("parallel",)),
        cost_estimate=cost,
    )(x, W1_pad, bias)

    return feat_slab


# --------------------- pure-JAX reference (e3nn semantics) ------------------

def reference(x, ws1, w2, atomic_scale, atomic_shift):
    outs = []
    oi = 0
    for w, (mi, l), (mo, _) in zip(ws1, IRREPS_IN, IRREPS_MID):
        d = 2 * l + 1
        xb = x[:, oi:oi + mi * d].reshape(x.shape[0], mi, d)
        yb = jnp.einsum("nid,io->nod", xb, w) / math.sqrt(mi)
        outs.append(yb.reshape(x.shape[0], mo * d))
        oi += mi * d
    feats = jnp.concatenate(outs, axis=-1)
    energy = feats[:, :SCALAR_MUL_MID] @ (w2 / math.sqrt(SCALAR_MUL_MID))
    energy = energy * atomic_scale + atomic_shift
    return feats, energy


if __name__ == "__main__":
    key = jax.random.PRNGKey(0)
    k_w, k_x = jax.random.split(key)

    ws1, w2 = make_params(k_w)
    atomic_scale, atomic_shift = 0.7, -1.3
    W1_pad, bias = expand_dense_weights(ws1, w2, atomic_scale, atomic_shift)

    N = 1000  # deliberately ragged (not a multiple of the tile)
    x = jax.random.normal(k_x, (N, DIN), dtype=jnp.float32)

    feat_slab = energy_head(x, W1_pad, bias, tile_n=1024)
    feat_slab = jax.block_until_ready(feat_slab)

    # "Consumer" indexing of the padded slab (kept out of the kernel wrapper).
    feats = feat_slab[:N, :DMID]
    energy = feat_slab[:N, ENERGY_COL:ENERGY_COL + 1]

    feats_ref, energy_ref = reference(x, ws1, w2, atomic_scale, atomic_shift)
    assert feat_slab.shape[1] == DMID_PAD
    assert feats.shape == (N, DMID) and energy.shape == (N, 1)
    assert jnp.allclose(feats, feats_ref, atol=1e-4, rtol=1e-4)
    assert jnp.allclose(energy, energy_ref, atol=1e-4, rtol=1e-4)

    print("KERNEL_OK")
</pallas_src>

<mosaic_0001>
module attributes {stable_mosaic.version = 11 : i64} {
  func.func @energy_head_kernel(%arg0: i32, %arg1: memref<504x30xf32, #tpu.memory_space<vmem>>, %arg2: memref<30x128xf32, #tpu.memory_space<vmem>>, %arg3: memref<1x128xf32, #tpu.memory_space<vmem>>, %arg4: memref<504x128xf32, #tpu.memory_space<vmem>>) attributes {dimension_semantics = [#tpu.dimension_semantics<parallel>], iteration_bounds = array<i64: 2>, scalar_prefetch = 0 : i64, scratch_operands = 0 : i64, tpu.core_type = #tpu.core_type<tc>, window_params = [{transform_indices = @transform_0, window_bounds = array<i64: 504, 30>}, {pipeline_mode = #tpu.pipeline_mode<synchronous>, transform_indices = @transform_1, window_bounds = array<i64: 30, 128>}, {pipeline_mode = #tpu.pipeline_mode<synchronous>, transform_indices = @transform_2, window_bounds = array<i64: 1, 128>}, {transform_indices = @transform_3, window_bounds = array<i64: 504, 128>}]} {
    %c0 = arith.constant 0 : index
    %c0_0 = arith.constant 0 : index
    %0 = vector.load %arg1[%c0, %c0_0] : memref<504x30xf32, #tpu.memory_space<vmem>>, vector<504x30xf32>
    %c0_1 = arith.constant 0 : index
    %c0_2 = arith.constant 0 : index
    %1 = vector.load %arg2[%c0_1, %c0_2] : memref<30x128xf32, #tpu.memory_space<vmem>>, vector<30x128xf32>
    %cst = arith.constant dense<0.000000e+00> : vector<504x128xf32>
    %2 = tpu.matmul %0, %1, %cst {dimension_numbers = #tpu.dot_dimension_numbers<[1], [0], [0], [1], [0, 0, 1, 1], [], []>} : vector<504x30xf32>, vector<30x128xf32>, vector<504x128xf32> -> vector<504x128xf32>
    %c0_3 = arith.constant 0 : index
    %c0_4 = arith.constant 0 : index
    %3 = vector.load %arg3[%c0_3, %c0_4] : memref<1x128xf32, #tpu.memory_space<vmem>>, vector<1x128xf32>
    %4 = vector.broadcast %3 : vector<1x128xf32> to vector<504x128xf32>
    %5 = arith.addf %2, %4 : vector<504x128xf32>
    %c0_5 = arith.constant 0 : index
    %c0_6 = arith.constant 0 : index
    %6 = vector.load %arg4[%c0_5, %c0_6] : memref<504x128xf32, #tpu.memory_space<vmem>>, vector<504x128xf32>
    tpu.vector_store %arg4[%c0_5, %c0_6], %5 {strides = array<i32>} : memref<504x128xf32, #tpu.memory_space<vmem>>, vector<504x128xf32>,
    return
  }
  func.func @transform_0(%arg0: i32) -> (i32, i32) {
    %c0_i32 = arith.constant 0 : i32
    %c0_i32_0 = arith.constant 0 : i32
    return %arg0, %c0_i32 : i32, i32
  }
  func.func @transform_1(%arg0: i32) -> (i32, i32) {
    %c0_i32 = arith.constant 0 : i32
    %c0_i32_0 = arith.constant 0 : i32
    %c0_i32_1 = arith.constant 0 : i32
    return %c0_i32, %c0_i32_0 : i32, i32
  }
  func.func @transform_2(%arg0: i32) -> (i32, i32) {
    %c0_i32 = arith.constant 0 : i32
    %c0_i32_0 = arith.constant 0 : i32
    %c0_i32_1 = arith.constant 0 : i32
    return %c0_i32, %c0_i32_0 : i32, i32
  }
  func.func @transform_3(%arg0: i32) -> (i32, i32) {
    %c0_i32 = arith.constant 0 : i32
    %c0_i32_0 = arith.constant 0 : i32
    return %arg0, %c0_i32 : i32, i32
  }
}

</mosaic_0001>

<llo_original>
// kernel: tpu_custom_call.1
$region0: #{tpu_custom_call.1}
  #allocation0 [shape = 'u32[]', space=smem, size = 0x4, offset = 0x4, fixed_abs, tag = 'smem constant byte address 0x4 - core index']
  #allocation1 [shape = 'u32[144,128]{1,0:T(1,128)}', space=vmem, size = 0x12000, scoped, tag = 'internal scratch']
  %s0 = inlined_call_operand.vmem [shape: f32[1008,30], index: 0, kind: input, shape index: {}]
  %s1 = inlined_call_operand.vmem [shape: f32[30,128], index: 1, kind: input, shape index: {}]
  %s2 = inlined_call_operand.vmem [shape: f32[1,128], index: 2, kind: input, shape index: {}]
  %s3 = inlined_call_operand.hbm [shape: f32[1008,128], index: 3, kind: output, shape index: {}]
  %s4 = sld [smem:[#allocation0]]
  $region45: #{tpu_custom_call.1} parent=0
    _
  %s6 = ssub.s32 1, %s4
  %s7 = scalar_select 0, %s6, %s4
  $region1: #{tpu_custom_call.1} parent=0
    #allocation2 [shape = 'u8[516096]{0}', space=vmem, size = 0x7e000, scoped, tag = 'output window, operand 0']
    #allocation3 [shape = 's32[2]{0}', space=sflag, size = 0x8, scoped, tag = 'scoped memory for tpu_custom_call.1']
    %8 = vsyncpa [#allocation3], 0
    %s9 = scalar_lea.sflag [#allocation3], 1
    %10 = vsyncpa %s9, 0
    loop: start=0, step=1, limit=4
    $region2: #{tpu_custom_call.1} parent=1 // loop_pre_header
      _
    $region3: #{tpu_custom_call.1} parent=1 // loop_header
      %s12 = sphi 0, %s16
      %p13 = scmp.ge.s32.totalorder %s12, 4
      %s22 = sphi 0, %s24
      %s25 = sphi 0, %s22
      %s26 = sphi 0, %s25
      %s42 = sphi 0, %s26
      %s46 = sphi 0, %s46
      %s48 = sphi 0, %s46
      %s49 = sphi 0, %s48
      %s63 = sphi 0, %s49
      %s67 = sphi 0, %s67
      %s69 = sphi 0, %s67
      %s70 = sphi 0, %s69
      %s84 = sphi 0, %s70
      %s90 = sphi 0, %s92
      %s93 = sphi 0, %s90
      %s94 = sphi 0, %s93
      %s110 = sphi 0, %s94
    $region4: #{tpu_custom_call.1} parent=1 // loop_header_branch
      %15 = sbr.rel (%p13) target = $region8
    $region5: #{tpu_custom_call.1} parent=1 // loop_body
      %s17 = ssub.s32 %s12, 1
      %s18 = ssub.s32 %s12, 2
      %s19 = sadd.s32 %s12, 1
      %s20 = ssub.s32 %s12, %s19
      %p21 = scmp.eq.s32.totalorder %s20, 0
      %s23 = sadd.s32 %s22, 1
      %s24 = scalar_select %p21, %s22, %s23
      %p27 = pneg %p21
      %p28 = scmp.eq.s32.totalorder %s12, 1
      %p29 = por %p27, %p28
      %p30 = scmp.ne.s32.totalorder %s22, %s25
      %p31 = scmp.eq.s32.totalorder %s12, 0
      %p32 = por %p30, %p31
      %p33 = scmp.ne.s32.totalorder %s22, %s25
      %p34 = scmp.eq.s32.totalorder %s17, 1
      %p35 = por %p33, %p34
      %p36 = scmp.ne.s32.totalorder %s25, %s26
      %p37 = scmp.eq.s32.totalorder %s17, 0
      %p38 = por %p36, %p37
      %p39 = scmp.ne.s32.totalorder %s25, %s26
      %p40 = scmp.eq.s32.totalorder %s18, 1
      %p41 = por %p39, %p40
      %p43 = scmp.ne.s32.totalorder %s26, %s42
      %p44 = scmp.eq.s32.totalorder %s18, 0
      %p45 = por %p43, %p44
      %s47 = sadd.s32 %s46, 1
      %p50 = scmp.eq.s32.totalorder %s12, 1
      %p51 = scmp.ne.s32.totalorder %s46, %s48
      %p52 = scmp.eq.s32.totalorder %s12, 0
      %p53 = por %p51, %p52
      %p54 = scmp.ne.s32.totalorder %s46, %s48
      %p55 = scmp.eq.s32.totalorder %s17, 1
      %p56 = por %p54, %p55
      %p57 = scmp.ne.s32.totalorder %s48, %s49
      %p58 = scmp.eq.s32.totalorder %s17, 0
      %p59 = por %p57, %p58
      %p60 = scmp.ne.s32.totalorder %s48, %s49
      %p61 = scmp.eq.s32.totalorder %s18, 1
      %p62 = por %p60, %p61
      %p64 = scmp.ne.s32.totalorder %s49, %s63
      %p65 = scmp.eq.s32.totalorder %s18, 0
      %p66 = por %p64, %p65
      %s68 = sadd.s32 %s67, 1
      %p71 = scmp.eq.s32.totalorder %s12, 1
      %p72 = scmp.ne.s32.totalorder %s67, %s69
      %p73 = scmp.eq.s32.totalorder %s12, 0
      %p74 = por %p72, %p73
      %p75 = scmp.ne.s32.totalorder %s67, %s69
      %p76 = scmp.eq.s32.totalorder %s17, 1
      %p77 = por %p75, %p76
      %p78 = scmp.ne.s32.totalorder %s69, %s70
      %p79 = scmp.eq.s32.totalorder %s17, 0
      %p80 = por %p78, %p79
      %p81 = scmp.ne.s32.totalorder %s69, %s70
      %p82 = scmp.eq.s32.totalorder %s18, 1
      %p83 = por %p81, %p82
      %p85 = scmp.ne.s32.totalorder %s70, %s84
      %p86 = scmp.eq.s32.totalorder %s18, 0
      %p87 = por %p85, %p86
      %s88 = ssub.s32 %s12, %s19
      %p89 = scmp.eq.s32.totalorder %s88, 0
      %s91 = sadd.s32 %s90, 1
      %s92 = scalar_select %p89, %s90, %s91
      %p95 = pneg %p89
      %p96 = scmp.eq.s32.totalorder %s12, 1
      %p97 = por %p95, %p96
      %p98 = scmp.ne.s32.totalorder %s90, %s93
      %p99 = scmp.eq.s32.totalorder %s12, 0
      %p100 = por %p98, %p99
      %p101 = scmp.ne.s32.totalorder %s90, %s93
      %p102 = scmp.eq.s32.totalorder %s17, 1
      %p103 = por %p101, %p102
      %p104 = scmp.ne.s32.totalorder %s93, %s94
      %p105 = scmp.eq.s32.totalorder %s17, 0
      %p106 = por %p104, %p105
      %p107 = scmp.ne.s32.totalorder %s93, %s94
      %p108 = scmp.eq.s32.totalorder %s18, 1
      %p109 = por %p107, %p108
      %p111 = scmp.ne.s32.totalorder %s94, %s110
      %p112 = scmp.eq.s32.totalorder %s18, 0
      %p113 = por %p111, %p112
      %p114 = scmp.le.s32.totalorder 1, %s12
      %p115 = scmp.lt.s32.totalorder %s12, 3
      %p116 = pnand %p114, %p115
      %p117 = pneg %p116
      // Predicated region
      $region9: #{tpu_custom_call.1} parent=5 // pred_check
        _
      $region10: #{tpu_custom_call.1} parent=5 // pred_check_branch
        %119 = sbr.rel (%p116) target = $region12
      $region11: #{tpu_custom_call.1} parent=5 // pred_region
        %s120 = ssub.s32 %s12, 1
        // Predicated region
        $region13: #{tpu_custom_call.1} parent=11 // pred_check
          %p121 = pneg %p59
        $region14: #{tpu_custom_call.1} parent=11 // pred_check_branch
          %123 = sbr.rel (%p121) target = $region16
        $region15: #{tpu_custom_call.1} parent=11 // pred_region
          _
        $region16: #{tpu_custom_call.1} parent=11 // pred_fallthru
          _
        // Predicated region
        $region17: #{tpu_custom_call.1} parent=11 // pred_check
          %p124 = pneg %p80
        $region18: #{tpu_custom_call.1} parent=11 // pred_check_branch
          %126 = sbr.rel (%p124) target = $region20
        $region19: #{tpu_custom_call.1} parent=11 // pred_region
          _
        $region20: #{tpu_custom_call.1} parent=11 // pred_fallthru
          _
      $region12: #{tpu_custom_call.1} parent=5 // pred_fallthru
        _
      %p127 = scmp.lt.s32.totalorder %s12, 2
      // Predicated region
      $region21: #{tpu_custom_call.1} parent=5 // pred_check
        %p128 = pneg %p127
      $region22: #{tpu_custom_call.1} parent=5 // pred_check_branch
        %130 = sbr.rel (%p128) target = $region24
      $region23: #{tpu_custom_call.1} parent=5 // pred_region
        // Predicated region
        $region25: #{tpu_custom_call.1} parent=23 // pred_check
          %p131 = pneg %p32
        $region26: #{tpu_custom_call.1} parent=23 // pred_check_branch
          %133 = sbr.rel (%p131) target = $region28
        $region27: #{tpu_custom_call.1} parent=23 // pred_region
          %s134 = smul.u32 63, %s12
          %p135 = scmp.lt.s32.totalorder %s134, 125
          %s136 = scalar_select %p135, %s134, 125
          %s137 = smul.addr %s136, 8
          %s138 = scalar_lea.vmem %s0, %s137
          %s139 = smul.u32 63, %s12
        $region28: #{tpu_custom_call.1} parent=23 // pred_fallthru
          _
      $region24: #{tpu_custom_call.1} parent=5 // pred_fallthru
        _
      %p140 = scmp.le.s32.totalorder 1, %s12
      %p141 = scmp.lt.s32.totalorder %s12, 3
      %p142 = pnand %p140, %p141
      %p143 = pneg %p142
      // Predicated region
      $region29: #{tpu_custom_call.1} parent=5 // pred_check
        _
      $region30: #{tpu_custom_call.1} parent=5 // pred_check_branch
        %145 = sbr.rel (%p142) target = $region32
      $region31: #{tpu_custom_call.1} parent=5 // pred_region
        %s146 = ssub.s32 %s12, 1
        %s147 = smul.u32 63, %s17
        %p148 = scmp.lt.s32.totalorder %s147, 125
        %s149 = scalar_select %p148, %s147, 125
        %s150 = smul.addr %s149, 8
        %s151 = scalar_lea.vmem %s0, %s150
        %p152 = pneg %p38
        %p153 = pneg %p35
        %p154 = pneg %p59
        %p155 = pneg %p56
        %p156 = pneg %p80
        %p157 = pneg %p77
        %p158 = pneg %p106
        %p159 = pneg %p103
        %s160 = sand.u32 %s93, 1
        %s161 = scalar_lea.sflag [#allocation3], %s160
        %s162 = sand.u32 %s93, 1
        %s163 = smul.addr %s162, 504
        %s164 = scalar_lea.vmem [#allocation2], %s163
        %s165 = smul.u32 63, %s17
        %p166 = scmp.lt.s32.totalorder %s165, 125
        %s167 = scalar_select %p166, %s165, 125
        %s168 = smul.addr %s167, 8
        %s169 = scalar_lea.vmem %s0, %s168
        %s170 = smul.u32 63, %s17
        %s171 = smul.u32 63, %s17
        %v172 = vld [vmem:[%s169] sm:$0xff]
        %v173 = vld [vmem:[%s169 + $0x8] sm:$0xff]
        %v174 = vld [vmem:[%s169 + $0x10] sm:$0xff]
        %v175 = vld [vmem:[%s169 + $0x18] sm:$0xff]
        %v176 = vld [vmem:[%s169 + $0x20] sm:$0xff]
        %v177 = vld [vmem:[%s169 + $0x28] sm:$0xff]
        %v178 = vld [vmem:[%s169 + $0x30] sm:$0xff]
        %v179 = vld [vmem:[%s169 + $0x38] sm:$0xff]
        %v180 = vld [vmem:[%s169 + $0x40] sm:$0xff]
        %v181 = vld [vmem:[%s169 + $0x48] sm:$0xff]
        %v182 = vld [vmem:[%s169 + $0x50] sm:$0xff]
        %v183 = vld [vmem:[%s169 + $0x58] sm:$0xff]
        %v184 = vld [vmem:[%s169 + $0x60] sm:$0xff]
        %v185 = vld [vmem:[%s169 + $0x68] sm:$0xff]
        %v186 = vld [vmem:[%s169 + $0x70] sm:$0xff]
        %v187 = vld [vmem:[%s169 + $0x78] sm:$0xff]
        %v188 = vld [vmem:[%s169 + $0x80] sm:$0xff]
        %v189 = vld [vmem:[%s169 + $0x88] sm:$0xff]
        %v190 = vld [vmem:[%s169 + $0x90] sm:$0xff]
        %v191 = vld [vmem:[%s169 + $0x98] sm:$0xff]
        %v192 = vld [vmem:[%s169 + $0xa0] sm:$0xff]
        %v193 = vld [vmem:[%s169 + $0xa8] sm:$0xff]
        %v194 = vld [vmem:[%s169 + $0xb0] sm:$0xff]
        %v195 = vld [vmem:[%s169 + $0xb8] sm:$0xff]
        %v196 = vld [vmem:[%s169 + $0xc0] sm:$0xff]
        %v197 = vld [vmem:[%s169 + $0xc8] sm:$0xff]
        %v198 = vld [vmem:[%s169 + $0xd0] sm:$0xff]
        %v199 = vld [vmem:[%s169 + $0xd8] sm:$0xff]
        %v200 = vld [vmem:[%s169 + $0xe0] sm:$0xff]
        %v201 = vld [vmem:[%s169 + $0xe8] sm:$0xff]
        %v202 = vld [vmem:[%s169 + $0xf0] sm:$0xff]
        %v203 = vld [vmem:[%s169 + $0xf8] sm:$0xff]
        %v204 = vld [vmem:[%s169 + $0x100] sm:$0xff]
        %v205 = vld [vmem:[%s169 + $0x108] sm:$0xff]
        %v206 = vld [vmem:[%s169 + $0x110] sm:$0xff]
        %v207 = vld [vmem:[%s169 + $0x118] sm:$0xff]
        %v208 = vld [vmem:[%s169 + $0x120] sm:$0xff]
        %v209 = vld [vmem:[%s169 + $0x128] sm:$0xff]
        %v210 = vld [vmem:[%s169 + $0x130] sm:$0xff]
        %v211 = vld [vmem:[%s169 + $0x138] sm:$0xff]
        %v212 = vld [vmem:[%s169 + $0x140] sm:$0xff]
        %v213 = vld [vmem:[%s169 + $0x148] sm:$0xff]
        %v214 = vld [vmem:[%s169 + $0x150] sm:$0xff]
        %v215 = vld [vmem:[%s169 + $0x158] sm:$0xff]
        %v216 = vld [vmem:[%s169 + $0x160] sm:$0xff]
        %v217 = vld [vmem:[%s169 + $0x168] sm:$0xff]
        %v218 = vld [vmem:[%s169 + $0x170] sm:$0xff]
        %v219 = vld [vmem:[%s169 + $0x178] sm:$0xff]
        %v220 = vld [vmem:[%s169 + $0x180] sm:$0xff]
        %v221 = vld [vmem:[%s169 + $0x188] sm:$0xff]
        %v222 = vld [vmem:[%s169 + $0x190] sm:$0xff]
        %v223 = vld [vmem:[%s169 + $0x198] sm:$0xff]
        %v224 = vld [vmem:[%s169 + $0x1a0] sm:$0xff]
        %v225 = vld [vmem:[%s169 + $0x1a8] sm:$0xff]
        %v226 = vld [vmem:[%s169 + $0x1b0] sm:$0xff]
        %v227 = vld [vmem:[%s169 + $0x1b8] sm:$0xff]
        %v228 = vld [vmem:[%s169 + $0x1c0] sm:$0xff]
        %v229 = vld [vmem:[%s169 + $0x1c8] sm:$0xff]
        %v230 = vld [vmem:[%s169 + $0x1d0] sm:$0xff]
        %v231 = vld [vmem:[%s169 + $0x1d8] sm:$0xff]
        %v232 = vld [vmem:[%s169 + $0x1e0] sm:$0xff]
        %v233 = vld [vmem:[%s169 + $0x1e8] sm:$0xff]
        %v234 = vld [vmem:[%s169 + $0x1f0] sm:$0xff]
        %v235 = vld [vmem:[%s1] sm:$0xff]
        %v236 = vld [vmem:[%s1 + $0x8] sm:$0xff]
        %v237 = vld [vmem:[%s1 + $0x10] sm:$0xff]
        %v238 = vld [vmem:[%s1 + $0x18] sm:$0x3f]
        %v239 = vld [vmem:[%s2] sm:$0x1]
        %v241 = vlaneseq
        %v242 = vshrl.u32 %v241, 7
        %v243 = vsub.s32 0, %v242
        %v244 = vrot.slane %v239, %v243
        %vm246 = vcmask 244736
        %v248 = vsel %vm246, %v172, 0
        %v251 = vsel %vm246, %v173, 0
        %v254 = vsel %vm246, %v174, 0
        %v257 = vsel %vm246, %v175, 0
        %v260 = vsel %vm246, %v176, 0
        %v263 = vsel %vm246, %v177, 0
        %v266 = vsel %vm246, %v178, 0
        %v269 = vsel %vm246, %v179, 0
        %v272 = vsel %vm246, %v180, 0
        %v275 = vsel %vm246, %v181, 0
        %v278 = vsel %vm246, %v182, 0
        %v281 = vsel %vm246, %v183, 0
        %v284 = vsel %vm246, %v184, 0
        %v287 = vsel %vm246, %v185, 0
        %v290 = vsel %vm246, %v186, 0
        %v293 = vsel %vm246, %v187, 0
        %v296 = vsel %vm246, %v188, 0
        %v299 = vsel %vm246, %v189, 0
        %v302 = vsel %vm246, %v190, 0
        %v305 = vsel %vm246, %v191, 0
        %v308 = vsel %vm246, %v192, 0
        %v311 = vsel %vm246, %v193, 0
        %v314 = vsel %vm246, %v194, 0
        %v317 = vsel %vm246, %v195, 0
        %v320 = vsel %vm246, %v196, 0
        %v323 = vsel %vm246, %v197, 0
        %v326 = vsel %vm246, %v198, 0
        %v329 = vsel %vm246, %v199, 0
        %v332 = vsel %vm246, %v200, 0
        %v335 = vsel %vm246, %v201, 0
        %v338 = vsel %vm246, %v202, 0
        %v341 = vsel %vm246, %v203, 0
        %v344 = vsel %vm246, %v204, 0
        %v347 = vsel %vm246, %v205, 0
        %v350 = vsel %vm246, %v206, 0
        %v353 = vsel %vm246, %v207, 0
        %v356 = vsel %vm246, %v208, 0
        %v359 = vsel %vm246, %v209, 0
        %v362 = vsel %vm246, %v210, 0
        %v365 = vsel %vm246, %v211, 0
        %v368 = vsel %vm246, %v212, 0
        %v371 = vsel %vm246, %v213, 0
        %v374 = vsel %vm246, %v214, 0
        %v377 = vsel %vm246, %v215, 0
        %v380 = vsel %vm246, %v216, 0
        %v383 = vsel %vm246, %v217, 0
        %v386 = vsel %vm246, %v218, 0
        %v389 = vsel %vm246, %v219, 0
        %v392 = vsel %vm246, %v220, 0
        %v395 = vsel %vm246, %v221, 0
        %v398 = vsel %vm246, %v222, 0
        %v401 = vsel %vm246, %v223, 0
        %v404 = vsel %vm246, %v224, 0
        %v407 = vsel %vm246, %v225, 0
        %v410 = vsel %vm246, %v226, 0
        %v413 = vsel %vm246, %v227, 0
        %v416 = vsel %vm246, %v228, 0
        %v419 = vsel %vm246, %v229, 0
        %v422 = vsel %vm246, %v230, 0
        %v425 = vsel %vm246, %v231, 0
        %v428 = vsel %vm246, %v232, 0
        %v431 = vsel %vm246, %v233, 0
        %v434 = vsel %vm246, %v234, 0
        %vm436 = vcmask 1045504
        %v438 = vsel %vm436, %v238, 0
        %440 = vmatprep.subr.mxu0 0.0
        %441 = vmatpush1.msra.mxu0 0.0
        %442 = vmatprep.subr.mxu0 0.0
        %443 = vmatpush1.msra.mxu0 0.0
        %444 = vmatprep.subr.mxu0 0.0
        %445 = vmatpush1.msra.mxu0 0.0
        %446 = vmatprep.subr.mxu0 0.0
        %447 = vmatpush1.msra.mxu0 0.0
        %448 = vmatprep.subr.mxu0 0.0
        %449 = vmatpush1.msra.mxu0 0.0
        %450 = vmatprep.subr.mxu0 0.0
        %451 = vmatpush1.msra.mxu0 0.0
        %452 = vmatprep.subr.mxu0 0.0
        %453 = vmatpush1.msra.mxu0 0.0
        %454 = vmatprep.subr.mxu0 0.0
        %455 = vmatpush1.msra.mxu0 0.0
        %456 = vmatprep.subr.mxu0 0.0
        %457 = vmatpush1.msra.mxu0 0.0
        %458 = vmatprep.subr.mxu0 0.0
        %459 = vmatpush1.msra.mxu0 0.0
        %460 = vmatprep.subr.mxu0 0.0
        %461 = vmatpush1.msra.mxu0 0.0
        %462 = vmatprep.subr.mxu0 0.0
        %463 = vmatpush1.msra.mxu0 0.0
        %464 = vmatprep.subr.mxu0 0.0
        %465 = vmatpush1.msra.mxu0 %v438
        %466 = vmatprep.subr.mxu0 0.0
        %467 = vmatpush1.msra.mxu0 %v237
        %468 = vmatprep.subr.mxu0 0.0
        %469 = vmatpush1.msra.mxu0 %v236
        %470 = vmatprep.subr.mxu0 0.0
        %471 = vmatpush1.msra.mxu0 %v235
        %472 = vmatprep.subr.mxu0 0.0
        %473 = vmatpush2.msra.mxu0 0.0
        %474 = vmatprep.subr.mxu0 0.0
        %475 = vmatpush2.msra.mxu0 0.0
        %476 = vmatprep.subr.mxu0 0.0
        %477 = vmatpush2.msra.mxu0 0.0
        %478 = vmatprep.subr.mxu0 0.0
        %479 = vmatpush2.msra.mxu0 0.0
        %480 = vmatprep.subr.mxu0 0.0
        %481 = vmatpush2.msra.mxu0 0.0
        %482 = vmatprep.subr.mxu0 0.0
        %483 = vmatpush2.msra.mxu0 0.0
        %484 = vmatprep.subr.mxu0 0.0
        %485 = vmatpush2.msra.mxu0 0.0
        %486 = vmatprep.subr.mxu0 0.0
        %487 = vmatpush2.msra.mxu0 0.0
        %488 = vmatprep.subr.mxu0 0.0
        %489 = vmatpush2.msra.mxu0 0.0
        %490 = vmatprep.subr.mxu0 0.0
        %491 = vmatpush2.msra.mxu0 0.0
        %492 = vmatprep.subr.mxu0 0.0
        %493 = vmatpush2.msra.mxu0 0.0
        %494 = vmatprep.subr.mxu0 0.0
        %495 = vmatpush2.msra.mxu0 0.0
        %496 = vmatprep.subr.mxu0 0.0
        %497 = vmatpush2.msra.mxu0 0.0
        %498 = vmatprep.subr.mxu0 0.0
        %499 = vmatpush2.msra.mxu0 0.0
        %500 = vmatprep.subr.mxu0 0.0
        %501 = vmatpush2.msra.mxu0 0.0
        %502 = vmatprep.subr.mxu0 0.0
        %503 = vmatpush2.msra.mxu0 0.0
        %504 = vmatprep.mubr.f32.mxu0 0.0
        %505 = vmatmul.mubr.f32.gmra.mxu0 %v248
        %v506 = vpop.f32.mrf.mxu0
        %v507 = vadd.f32 %v244, %v506
        %v508 = vpop.f32.mrf.mxu0
        %509 = vmatprep.mubr.f32.mxu0 0.0
        %510 = vmatmul.mubr.f32.gmra.mxu0 %v251
        %v511 = vpop.f32.mrf.mxu0
        %v512 = vadd.f32 %v244, %v511
        %v513 = vpop.f32.mrf.mxu0
        %514 = vmatprep.mubr.f32.mxu0 0.0
        %515 = vmatmul.mubr.f32.gmra.mxu0 %v254
        %v516 = vpop.f32.mrf.mxu0
        %v517 = vadd.f32 %v244, %v516
        %v518 = vpop.f32.mrf.mxu0
        %519 = vmatprep.mubr.f32.mxu0 0.0
        %520 = vmatmul.mubr.f32.gmra.mxu0 %v257
        %v521 = vpop.f32.mrf.mxu0
        %v522 = vadd.f32 %v244, %v521
        %v523 = vpop.f32.mrf.mxu0
        %524 = vmatprep.mubr.f32.mxu0 0.0
        %525 = vmatmul.mubr.f32.gmra.mxu0 %v260
        %v526 = vpop.f32.mrf.mxu0
        %v527 = vadd.f32 %v244, %v526
        %v528 = vpop.f32.mrf.mxu0
        %529 = vmatprep.mubr.f32.mxu0 0.0
        %530 = vmatmul.mubr.f32.gmra.mxu0 %v263
        %v531 = vpop.f32.mrf.mxu0
        %v532 = vadd.f32 %v244, %v531
        %v533 = vpop.f32.mrf.mxu0
        %534 = vmatprep.mubr.f32.mxu0 0.0
        %535 = vmatmul.mubr.f32.gmra.mxu0 %v266
        %v536 = vpop.f32.mrf.mxu0
        %v537 = vadd.f32 %v244, %v536
        %v538 = vpop.f32.mrf.mxu0
        %539 = vmatprep.mubr.f32.mxu0 0.0
        %540 = vmatmul.mubr.f32.gmra.mxu0 %v269
        %v541 = vpop.f32.mrf.mxu0
        %v542 = vadd.f32 %v244, %v541
        %v543 = vpop.f32.mrf.mxu0
        %544 = vmatprep.mubr.f32.mxu0 0.0
        %545 = vmatmul.mubr.f32.gmra.mxu0 %v272
        %v546 = vpop.f32.mrf.mxu0
        %v547 = vadd.f32 %v244, %v546
        %v548 = vpop.f32.mrf.mxu0
        %549 = vmatprep.mubr.f32.mxu0 0.0
        %550 = vmatmul.mubr.f32.gmra.mxu0 %v275
        %v551 = vpop.f32.mrf.mxu0
        %v552 = vadd.f32 %v244, %v551
        %v553 = vpop.f32.mrf.mxu0
        %554 = vmatprep.mubr.f32.mxu0 0.0
        %555 = vmatmul.mubr.f32.gmra.mxu0 %v278
        %v556 = vpop.f32.mrf.mxu0
        %v557 = vadd.f32 %v244, %v556
        %v558 = vpop.f32.mrf.mxu0
        %559 = vmatprep.mubr.f32.mxu0 0.0
        %560 = vmatmul.mubr.f32.gmra.mxu0 %v281
        %v561 = vpop.f32.mrf.mxu0
        %v562 = vadd.f32 %v244, %v561
        %v563 = vpop.f32.mrf.mxu0
        %564 = vmatprep.mubr.f32.mxu0 0.0
        %565 = vmatmul.mubr.f32.gmra.mxu0 %v284
        %v566 = vpop.f32.mrf.mxu0
        %v567 = vadd.f32 %v244, %v566
        %v568 = vpop.f32.mrf.mxu0
        %569 = vmatprep.mubr.f32.mxu0 0.0
        %570 = vmatmul.mubr.f32.gmra.mxu0 %v287
        %v571 = vpop.f32.mrf.mxu0
        %v572 = vadd.f32 %v244, %v571
        %v573 = vpop.f32.mrf.mxu0
        %574 = vmatprep.mubr.f32.mxu0 0.0
        %575 = vmatmul.mubr.f32.gmra.mxu0 %v290
        %v576 = vpop.f32.mrf.mxu0
        %v577 = vadd.f32 %v244, %v576
        %v578 = vpop.f32.mrf.mxu0
        %579 = vmatprep.mubr.f32.mxu0 0.0
        %580 = vmatmul.mubr.f32.gmra.mxu0 %v293
        %v581 = vpop.f32.mrf.mxu0
        %v582 = vadd.f32 %v244, %v581
        %v583 = vpop.f32.mrf.mxu0
        %584 = vmatprep.mubr.f32.mxu0 0.0
        %585 = vmatmul.mubr.f32.gmra.mxu0 %v296
        %v586 = vpop.f32.mrf.mxu0
        %v587 = vadd.f32 %v244, %v586
        %v588 = vpop.f32.mrf.mxu0
        %589 = vmatprep.mubr.f32.mxu0 0.0
        %590 = vmatmul.mubr.f32.gmra.mxu0 %v299
        %v591 = vpop.f32.mrf.mxu0
        %v592 = vadd.f32 %v244, %v591
        %v593 = vpop.f32.mrf.mxu0
        %594 = vmatprep.mubr.f32.mxu0 0.0
        %595 = vmatmul.mubr.f32.gmra.mxu0 %v302
        %v596 = vpop.f32.mrf.mxu0
        %v597 = vadd.f32 %v244, %v596
        %v598 = vpop.f32.mrf.mxu0
        %599 = vmatprep.mubr.f32.mxu0 0.0
        %600 = vmatmul.mubr.f32.gmra.mxu0 %v305
        %v601 = vpop.f32.mrf.mxu0
        %v602 = vadd.f32 %v244, %v601
        %v603 = vpop.f32.mrf.mxu0
        %604 = vmatprep.mubr.f32.mxu0 0.0
        %605 = vmatmul.mubr.f32.gmra.mxu0 %v308
        %v606 = vpop.f32.mrf.mxu0
        %v607 = vadd.f32 %v244, %v606
        %v608 = vpop.f32.mrf.mxu0
        %609 = vmatprep.mubr.f32.mxu0 0.0
        %610 = vmatmul.mubr.f32.gmra.mxu0 %v311
        %v611 = vpop.f32.mrf.mxu0
        %v612 = vadd.f32 %v244, %v611
        %v613 = vpop.f32.mrf.mxu0
        %614 = vmatprep.mubr.f32.mxu0 0.0
        %615 = vmatmul.mubr.f32.gmra.mxu0 %v314
        %v616 = vpop.f32.mrf.mxu0
        %v617 = vadd.f32 %v244, %v616
        %v618 = vpop.f32.mrf.mxu0
        %619 = vmatprep.mubr.f32.mxu0 0.0
        %620 = vmatmul.mubr.f32.gmra.mxu0 %v317
        %v621 = vpop.f32.mrf.mxu0
        %v622 = vadd.f32 %v244, %v621
        %v623 = vpop.f32.mrf.mxu0
        %624 = vmatprep.mubr.f32.mxu0 0.0
        %625 = vmatmul.mubr.f32.gmra.mxu0 %v320
        %v626 = vpop.f32.mrf.mxu0
        %v627 = vadd.f32 %v244, %v626
        %v628 = vpop.f32.mrf.mxu0
        %629 = vmatprep.mubr.f32.mxu0 0.0
        %630 = vmatmul.mubr.f32.gmra.mxu0 %v323
        %v631 = vpop.f32.mrf.mxu0
        %v632 = vadd.f32 %v244, %v631
        %v633 = vpop.f32.mrf.mxu0
        %634 = vmatprep.mubr.f32.mxu0 0.0
        %635 = vmatmul.mubr.f32.gmra.mxu0 %v326
        %v636 = vpop.f32.mrf.mxu0
        %v637 = vadd.f32 %v244, %v636
        %v638 = vpop.f32.mrf.mxu0
        %639 = vmatprep.mubr.f32.mxu0 0.0
        %640 = vmatmul.mubr.f32.gmra.mxu0 %v329
        %v641 = vpop.f32.mrf.mxu0
        %v642 = vadd.f32 %v244, %v641
        %v643 = vpop.f32.mrf.mxu0
        %644 = vmatprep.mubr.f32.mxu0 0.0
        %645 = vmatmul.mubr.f32.gmra.mxu0 %v332
        %v646 = vpop.f32.mrf.mxu0
        %v647 = vadd.f32 %v244, %v646
        %v648 = vpop.f32.mrf.mxu0
        %649 = vmatprep.mubr.f32.mxu0 0.0
        %650 = vmatmul.mubr.f32.gmra.mxu0 %v335
        %v651 = vpop.f32.mrf.mxu0
        %v652 = vadd.f32 %v244, %v651
        %v653 = vpop.f32.mrf.mxu0
        %654 = vmatprep.mubr.f32.mxu0 0.0
        %655 = vmatmul.mubr.f32.gmra.mxu0 %v338
        %v656 = vpop.f32.mrf.mxu0
        %v657 = vadd.f32 %v244, %v656
        %v658 = vpop.f32.mrf.mxu0
        %659 = vmatprep.mubr.f32.mxu0 0.0
        %660 = vmatmul.mubr.f32.gmra.mxu0 %v341
        %v661 = vpop.f32.mrf.mxu0
        %v662 = vadd.f32 %v244, %v661
        %v663 = vpop.f32.mrf.mxu0
        %664 = vmatprep.mubr.f32.mxu0 0.0
        %665 = vmatmul.mubr.f32.gmra.mxu0 %v344
        %v666 = vpop.f32.mrf.mxu0
        %v667 = vadd.f32 %v244, %v666
        %v668 = vpop.f32.mrf.mxu0
        %669 = vmatprep.mubr.f32.mxu0 0.0
        %670 = vmatmul.mubr.f32.gmra.mxu0 %v347
        %v671 = vpop.f32.mrf.mxu0
        %v672 = vadd.f32 %v244, %v671
        %v673 = vpop.f32.mrf.mxu0
        %674 = vmatprep.mubr.f32.mxu0 0.0
        %675 = vmatmul.mubr.f32.gmra.mxu0 %v350
        %v676 = vpop.f32.mrf.mxu0
        %v677 = vadd.f32 %v244, %v676
        %v678 = vpop.f32.mrf.mxu0
        %679 = vmatprep.mubr.f32.mxu0 0.0
        %680 = vmatmul.mubr.f32.gmra.mxu0 %v353
        %v681 = vpop.f32.mrf.mxu0
        %v682 = vadd.f32 %v244, %v681
        %v683 = vpop.f32.mrf.mxu0
        %684 = vmatprep.mubr.f32.mxu0 0.0
        %685 = vmatmul.mubr.f32.gmra.mxu0 %v356
        %v686 = vpop.f32.mrf.mxu0
        %v687 = vadd.f32 %v244, %v686
        %v688 = vpop.f32.mrf.mxu0
        %689 = vmatprep.mubr.f32.mxu0 0.0
        %690 = vmatmul.mubr.f32.gmra.mxu0 %v359
        %v691 = vpop.f32.mrf.mxu0
        %v692 = vadd.f32 %v244, %v691
        %v693 = vpop.f32.mrf.mxu0
        %694 = vmatprep.mubr.f32.mxu0 0.0
        %695 = vmatmul.mubr.f32.gmra.mxu0 %v362
        %v696 = vpop.f32.mrf.mxu0
        %v697 = vadd.f32 %v244, %v696
        %v698 = vpop.f32.mrf.mxu0
        %699 = vmatprep.mubr.f32.mxu0 0.0
        %700 = vmatmul.mubr.f32.gmra.mxu0 %v365
        %v701 = vpop.f32.mrf.mxu0
        %v702 = vadd.f32 %v244, %v701
        %v703 = vpop.f32.mrf.mxu0
        %704 = vmatprep.mubr.f32.mxu0 0.0
        %705 = vmatmul.mubr.f32.gmra.mxu0 %v368
        %v706 = vpop.f32.mrf.mxu0
        %v707 = vadd.f32 %v244, %v706
        %v708 = vpop.f32.mrf.mxu0
        %709 = vmatprep.mubr.f32.mxu0 0.0
        %710 = vmatmul.mubr.f32.gmra.mxu0 %v371
        %v711 = vpop.f32.mrf.mxu0
        %v712 = vadd.f32 %v244, %v711
        %v713 = vpop.f32.mrf.mxu0
        %714 = vmatprep.mubr.f32.mxu0 0.0
        %715 = vmatmul.mubr.f32.gmra.mxu0 %v374
        %v716 = vpop.f32.mrf.mxu0
        %v717 = vadd.f32 %v244, %v716
        %v718 = vpop.f32.mrf.mxu0
        %719 = vmatprep.mubr.f32.mxu0 0.0
        %720 = vmatmul.mubr.f32.gmra.mxu0 %v377
        %v721 = vpop.f32.mrf.mxu0
        %v722 = vadd.f32 %v244, %v721
        %v723 = vpop.f32.mrf.mxu0
        %724 = vmatprep.mubr.f32.mxu0 0.0
        %725 = vmatmul.mubr.f32.gmra.mxu0 %v380
        %v726 = vpop.f32.mrf.mxu0
        %v727 = vadd.f32 %v244, %v726
        %v728 = vpop.f32.mrf.mxu0
        %729 = vmatprep.mubr.f32.mxu0 0.0
        %730 = vmatmul.mubr.f32.gmra.mxu0 %v383
        %v731 = vpop.f32.mrf.mxu0
        %v732 = vadd.f32 %v244, %v731
        %v733 = vpop.f32.mrf.mxu0
        %734 = vmatprep.mubr.f32.mxu0 0.0
        %735 = vmatmul.mubr.f32.gmra.mxu0 %v386
        %v736 = vpop.f32.mrf.mxu0
        %v737 = vadd.f32 %v244, %v736
        %v738 = vpop.f32.mrf.mxu0
        %739 = vmatprep.mubr.f32.mxu0 0.0
        %740 = vmatmul.mubr.f32.gmra.mxu0 %v389
        %v741 = vpop.f32.mrf.mxu0
        %v742 = vadd.f32 %v244, %v741
        %v743 = vpop.f32.mrf.mxu0
        %744 = vmatprep.mubr.f32.mxu0 0.0
        %745 = vmatmul.mubr.f32.gmra.mxu0 %v392
        %v746 = vpop.f32.mrf.mxu0
        %v747 = vadd.f32 %v244, %v746
        %v748 = vpop.f32.mrf.mxu0
        %749 = vmatprep.mubr.f32.mxu0 0.0
        %750 = vmatmul.mubr.f32.gmra.mxu0 %v395
        %v751 = vpop.f32.mrf.mxu0
        %v752 = vadd.f32 %v244, %v751
        %v753 = vpop.f32.mrf.mxu0
        %754 = vmatprep.mubr.f32.mxu0 0.0
        %755 = vmatmul.mubr.f32.gmra.mxu0 %v398
        %v756 = vpop.f32.mrf.mxu0
        %v757 = vadd.f32 %v244, %v756
        %v758 = vpop.f32.mrf.mxu0
        %759 = vmatprep.mubr.f32.mxu0 0.0
        %760 = vmatmul.mubr.f32.gmra.mxu0 %v401
        %v761 = vpop.f32.mrf.mxu0
        %v762 = vadd.f32 %v244, %v761
        %v763 = vpop.f32.mrf.mxu0
        %764 = vmatprep.mubr.f32.mxu0 0.0
        %765 = vmatmul.mubr.f32.gmra.mxu0 %v404
        %v766 = vpop.f32.mrf.mxu0
        %v767 = vadd.f32 %v244, %v766
        %v768 = vpop.f32.mrf.mxu0
        %769 = vmatprep.mubr.f32.mxu0 0.0
        %770 = vmatmul.mubr.f32.gmra.mxu0 %v407
        %v771 = vpop.f32.mrf.mxu0
        %v772 = vadd.f32 %v244, %v771
        %v773 = vpop.f32.mrf.mxu0
        %774 = vmatprep.mubr.f32.mxu0 0.0
        %775 = vmatmul.mubr.f32.gmra.mxu0 %v410
        %v776 = vpop.f32.mrf.mxu0
        %v777 = vadd.f32 %v244, %v776
        %v778 = vpop.f32.mrf.mxu0
        %779 = vmatprep.mubr.f32.mxu0 0.0
        %780 = vmatmul.mubr.f32.gmra.mxu0 %v413
        %v781 = vpop.f32.mrf.mxu0
        %v782 = vadd.f32 %v244, %v781
        %v783 = vpop.f32.mrf.mxu0
        %784 = vmatprep.mubr.f32.mxu0 0.0
        %785 = vmatmul.mubr.f32.gmra.mxu0 %v416
        %v786 = vpop.f32.mrf.mxu0
        %v787 = vadd.f32 %v244, %v786
        %v788 = vpop.f32.mrf.mxu0
        %789 = vmatprep.mubr.f32.mxu0 0.0
        %790 = vmatmul.mubr.f32.gmra.mxu0 %v419
        %v791 = vpop.f32.mrf.mxu0
        %v792 = vadd.f32 %v244, %v791
        %v793 = vpop.f32.mrf.mxu0
        %794 = vmatprep.mubr.f32.mxu0 0.0
        %795 = vmatmul.mubr.f32.gmra.mxu0 %v422
        %v796 = vpop.f32.mrf.mxu0
        %v797 = vadd.f32 %v244, %v796
        %v798 = vpop.f32.mrf.mxu0
        %799 = vmatprep.mubr.f32.mxu0 0.0
        %800 = vmatmul.mubr.f32.gmra.mxu0 %v425
        %v801 = vpop.f32.mrf.mxu0
        %v802 = vadd.f32 %v244, %v801
        %v803 = vpop.f32.mrf.mxu0
        %804 = vmatprep.mubr.f32.mxu0 0.0
        %805 = vmatmul.mubr.f32.gmra.mxu0 %v428
        %v806 = vpop.f32.mrf.mxu0
        %v807 = vadd.f32 %v244, %v806
        %v808 = vpop.f32.mrf.mxu0
        %809 = vmatprep.mubr.f32.mxu0 0.0
        %810 = vmatmul.mubr.f32.gmra.mxu0 %v431
        %v811 = vpop.f32.mrf.mxu0
        %v812 = vadd.f32 %v244, %v811
        %v813 = vpop.f32.mrf.mxu0
        %814 = vmatprep.mubr.f32.mxu0 0.0
        %815 = vmatmul.mubr.f32.gmra.mxu0 %v434
        %v816 = vpop.f32.mrf.mxu0
        %v817 = vadd.f32 %v244, %v816
        %v818 = vpop.f32.mrf.mxu0
        %819 = vdwg.mxu0
        %820 = vst [vmem:[%s164] sm:$0xff] %v507
        %821 = vst [vmem:[%s164 + $0x8] sm:$0xff] %v512
        %822 = vst [vmem:[%s164 + $0x10] sm:$0xff] %v517
        %823 = vst [vmem:[%s164 + $0x18] sm:$0xff] %v522
        %824 = vst [vmem:[%s164 + $0x20] sm:$0xff] %v527
        %825 = vst [vmem:[%s164 + $0x28] sm:$0xff] %v532
        %826 = vst [vmem:[%s164 + $0x30] sm:$0xff] %v537
        %827 = vst [vmem:[%s164 + $0x38] sm:$0xff] %v542
        %828 = vst [vmem:[%s164 + $0x40] sm:$0xff] %v547
        %829 = vst [vmem:[%s164 + $0x48] sm:$0xff] %v552
        %830 = vst [vmem:[%s164 + $0x50] sm:$0xff] %v557
        %831 = vst [vmem:[%s164 + $0x58] sm:$0xff] %v562
        %832 = vst [vmem:[%s164 + $0x60] sm:$0xff] %v567
        %833 = vst [vmem:[%s164 + $0x68] sm:$0xff] %v572
        %834 = vst [vmem:[%s164 + $0x70] sm:$0xff] %v577
        %835 = vst [vmem:[%s164 + $0x78] sm:$0xff] %v582
        %836 = vst [vmem:[%s164 + $0x80] sm:$0xff] %v587
        %837 = vst [vmem:[%s164 + $0x88] sm:$0xff] %v592
        %838 = vst [vmem:[%s164 + $0x90] sm:$0xff] %v597
        %839 = vst [vmem:[%s164 + $0x98] sm:$0xff] %v602
        %840 = vst [vmem:[%s164 + $0xa0] sm:$0xff] %v607
        %841 = vst [vmem:[%s164 + $0xa8] sm:$0xff] %v612
        %842 = vst [vmem:[%s164 + $0xb0] sm:$0xff] %v617
        %843 = vst [vmem:[%s164 + $0xb8] sm:$0xff] %v622
        %844 = vst [vmem:[%s164 + $0xc0] sm:$0xff] %v627
        %845 = vst [vmem:[%s164 + $0xc8] sm:$0xff] %v632
        %846 = vst [vmem:[%s164 + $0xd0] sm:$0xff] %v637
        %847 = vst [vmem:[%s164 + $0xd8] sm:$0xff] %v642
        %848 = vst [vmem:[%s164 + $0xe0] sm:$0xff] %v647
        %849 = vst [vmem:[%s164 + $0xe8] sm:$0xff] %v652
        %850 = vst [vmem:[%s164 + $0xf0] sm:$0xff] %v657
        %851 = vst [vmem:[%s164 + $0xf8] sm:$0xff] %v662
        %852 = vst [vmem:[%s164 + $0x100] sm:$0xff] %v667
        %853 = vst [vmem:[%s164 + $0x108] sm:$0xff] %v672
        %854 = vst [vmem:[%s164 + $0x110] sm:$0xff] %v677
        %855 = vst [vmem:[%s164 + $0x118] sm:$0xff] %v682
        %856 = vst [vmem:[%s164 + $0x120] sm:$0xff] %v687
        %857 = vst [vmem:[%s164 + $0x128] sm:$0xff] %v692
        %858 = vst [vmem:[%s164 + $0x130] sm:$0xff] %v697
        %859 = vst [vmem:[%s164 + $0x138] sm:$0xff] %v702
        %860 = vst [vmem:[%s164 + $0x140] sm:$0xff] %v707
        %861 = vst [vmem:[%s164 + $0x148] sm:$0xff] %v712
        %862 = vst [vmem:[%s164 + $0x150] sm:$0xff] %v717
        %863 = vst [vmem:[%s164 + $0x158] sm:$0xff] %v722
        %864 = vst [vmem:[%s164 + $0x160] sm:$0xff] %v727
        %865 = vst [vmem:[%s164 + $0x168] sm:$0xff] %v732
        %866 = vst [vmem:[%s164 + $0x170] sm:$0xff] %v737
        %867 = vst [vmem:[%s164 + $0x178] sm:$0xff] %v742
        %868 = vst [vmem:[%s164 + $0x180] sm:$0xff] %v747
        %869 = vst [vmem:[%s164 + $0x188] sm:$0xff] %v752
        %870 = vst [vmem:[%s164 + $0x190] sm:$0xff] %v757
        %871 = vst [vmem:[%s164 + $0x198] sm:$0xff] %v762
        %872 = vst [vmem:[%s164 + $0x1a0] sm:$0xff] %v767
        %873 = vst [vmem:[%s164 + $0x1a8] sm:$0xff] %v772
        %874 = vst [vmem:[%s164 + $0x1b0] sm:$0xff] %v777
        %875 = vst [vmem:[%s164 + $0x1b8] sm:$0xff] %v782
        %876 = vst [vmem:[%s164 + $0x1c0] sm:$0xff] %v787
        %877 = vst [vmem:[%s164 + $0x1c8] sm:$0xff] %v792
        %878 = vst [vmem:[%s164 + $0x1d0] sm:$0xff] %v797
        %879 = vst [vmem:[%s164 + $0x1d8] sm:$0xff] %v802
        %880 = vst [vmem:[%s164 + $0x1e0] sm:$0xff] %v807
        %881 = vst [vmem:[%s164 + $0x1e8] sm:$0xff] %v812
        %882 = vst [vmem:[%s164 + $0x1f0] sm:$0xff] %v817
        %s883 = sand.u32 %s93, 1
        %s884 = scalar_lea.sflag [#allocation3], %s883
        %s885 = sand.u32 %s93, 1
        %s886 = smul.addr %s885, 504
        %s887 = scalar_lea.vmem [#allocation2], %s886
        // Predicated region
        $region33: #{tpu_custom_call.1} parent=31 // pred_check
          %p888 = pneg %p103
        $region34: #{tpu_custom_call.1} parent=31 // pred_check_branch
          %890 = sbr.rel (%p888) target = $region36
        $region35: #{tpu_custom_call.1} parent=31 // pred_region
          %s891 = smul.u32 63, %s17
          %s893 = ssub.s32 8064, 8064
          %894 = vsyncadd %s884, %s893
          %s895 = smul.addr %s891, 128
          %s896 = scalar_lea.hbm %s3, %s895
          %s897 = sshll.u32 %s887, 4
          %s898 = int_to_ptr.vmem [resolvable:$true] %s897
          %903 = dma.vmem_to_hbm [thread:$0]  %s898, 8064, %s896, %s884, 128, 128, 8
        $region36: #{tpu_custom_call.1} parent=31 // pred_fallthru
          _
      $region32: #{tpu_custom_call.1} parent=5 // pred_fallthru
        _
      %p904 = scmp.le.s32.totalorder 2, %s12
      // Predicated region
      $region37: #{tpu_custom_call.1} parent=5 // pred_check
        %p905 = pneg %p904
      $region38: #{tpu_custom_call.1} parent=5 // pred_check_branch
        %907 = sbr.rel (%p905) target = $region40
      $region39: #{tpu_custom_call.1} parent=5 // pred_region
        %s908 = ssub.s32 %s12, 2
        // Predicated region
        $region41: #{tpu_custom_call.1} parent=39 // pred_check
          %p909 = pneg %p109
        $region42: #{tpu_custom_call.1} parent=39 // pred_check_branch
          %911 = sbr.rel (%p909) target = $region44
        $region43: #{tpu_custom_call.1} parent=39 // pred_region
          %s912 = sand.u32 %s94, 1
          %s913 = scalar_lea.sflag [#allocation3], %s912
          %s914 = sand.u32 %s94, 1
          %s915 = smul.addr %s914, 504
          %s916 = scalar_lea.vmem [#allocation2], %s915
          %917 = dma.done %s913, 8064
        $region44: #{tpu_custom_call.1} parent=39 // pred_fallthru
          _
      $region40: #{tpu_custom_call.1} parent=5 // pred_fallthru
        _
    $region6: #{tpu_custom_call.1} parent=1 // loop_footer
      %s16 = sadd.s32 1, %s12
    $region7: #{tpu_custom_call.1} parent=1 // loop_footer_branch
      %11 = sbr.rel target = $region3
    $region8: #{tpu_custom_call.1} parent=1 // loop_exit
      _
    %918 = vsyncpa [#allocation3], 1
    %s919 = scalar_lea.sflag [#allocation3], 1
    %920 = vsyncpa %s919, 1

</llo_original>
